<compile_context>
chip_gen: v6e
topology: v6e:2x2x1
jax: 0.10.0
libtpu: 0.0.40
codegen_flags: <defaults>
</compile_context>

<pallas_src>
import functools
import math

import jax
import jax.numpy as jnp
from jax import lax
from jax.experimental import pallas as pl
from jax.experimental.pallas import tpu as pltpu

# 1024 rows * 128 lanes * (5+2) ch * 4 B = 3.5 MiB per grid step; double
# buffered = 7 MiB + elementwise temporaries, comfortably inside the 32 MiB
# scoped-VMEM budget requested below on every TPU generation.
# TODO(synk): v6e/v7x could go to 2048 rows with a bigger vmem_limit_bytes once
# the bundle confirms no spill / internal-scratch regression.
_MAX_TILE_ROWS = 1024
_VMEM_LIMIT_BYTES = 32 * 1024 * 1024


def _prediction_loss_kernel(inp_ref, tgt_ref, out_ref, *, background_rate,
                            n_valid, tile_r):
    """One grid step = tile_r * 128 samples.

    inp_ref: [5, tile_r, 128]  channels = mu1, mu2, s1, s2, rho
    tgt_ref: [2, tile_r, 128]  channels = x1, x2
    out_ref: [1, 128]          lane-wise partial sums, resident across the grid
    """
    i = pl.program_id(0)

    @pl.when(i == 0)
    def _():
        out_ref[...] = jnp.zeros_like(out_ref)

    mu1 = inp_ref[0]
    mu2 = inp_ref[1]
    s1 = inp_ref[2]
    s2 = inp_ref[3]
    rho = inp_ref[4]
    x1 = tgt_ref[0]
    x2 = tgt_ref[1]

    n1 = x1 - mu1
    n2 = x2 - mu2

    # Foreground Gaussian N(x | mu, sigma, rho), single-reciprocal form:
    #   z = ((n1*s2)^2 + (n2*s1)^2) / (s1*s2)^2 - 2*rho*n1*n2 / (s1*s2)
    #   g = exp(-z / (2*(1 - rho^2))) / (2*pi*s1*s2*sqrt(1 - rho^2))
    ss = s1 * s2
    inv_ss = 1.0 / ss                      # exact (not approx): feeds exp arg
    r = lax.rsqrt(1.0 - rho * rho)
    inv_t = r * r
    a1 = n1 * s2
    a2 = n2 * s1
    z = (a1 * a1 + a2 * a2) * (inv_ss * inv_ss) - 2.0 * rho * n1 * n2 * inv_ss
    g_fg = jnp.exp(-0.5 * z * inv_t) * (inv_ss * r) * (0.5 / math.pi)

    # Background Gaussian N(x | mu, 3.0, rho=0), fully specialised:
    #   exp(-(n1^2 + n2^2) / 18) / (18 * pi)
    g_bg = jnp.exp((n1 * n1 + n2 * n2) * (-1.0 / 18.0)) * (1.0 / (18.0 * math.pi))

    values = -jnp.log(0.01 + background_rate * g_bg
                      + (0.99 - background_rate) * g_fg)

    block_start = i * (tile_r * 128)
    tile_is_full = block_start + tile_r * 128 <= n_valid

    @pl.when(tile_is_full)
    def _():  # interior tile: no padding possible -> unmasked sum
        out_ref[...] += jnp.sum(values, axis=0).reshape(1, 128)

    @pl.when(jnp.logical_not(tile_is_full))
    def _():  # tail tile: mask gather padding and grid out-of-bounds rows
        row = lax.broadcasted_iota(jnp.int32, (tile_r, 128), 0)
        lane = lax.broadcasted_iota(jnp.int32, (tile_r, 128), 1)
        valid = (block_start + row * 128 + lane) < n_valid
        out_ref[...] += jnp.sum(jnp.where(valid, values, 0.0),
                                axis=0).reshape(1, 128)


def prediction_loss(inputs, targets, batch_split, *, background_rate=0.2,
                    loss_multiplier=1.0, max_tile_rows=_MAX_TILE_ROWS):
    """JAX/Pallas equivalent of PredictionLoss.forward (keep_batch_dim=False).

    inputs : [pred_length, num_tracks, 5]  (mu1, mu2, s1, s2, rho)
    targets: [pred_length, num_tracks, 2]
    batch_split: int32 [batch_size + 1]; batch_split[:-1] are primary indices
    """
    pred_length = int(targets.shape[0])
    primaries = batch_split[:-1].astype(jnp.int32)
    batch_size = int(primaries.shape[0])
    n = pred_length * batch_size

    # Pad the gather indices (index 0 is always a valid track) so padding falls
    # out of the gather itself, and so b_pad * pred_length is a multiple of
    # 8 * 128 = 1024 samples (lane-dense, sublane-aligned reshape target).
    step = 1024 // math.gcd(pred_length, 1024)
    b_pad = -(-batch_size // step) * step
    n_pad = b_pad * pred_length
    assert n_pad < 2 ** 31, "sample index would overflow int32"
    prim_pad = jnp.pad(primaries, (0, b_pad - batch_size))

    # Gather primary tracks, then lay samples out channel-major / track-major
    # ([C, b_pad, T] -> [C, R, 128]) so every per-channel slice in the kernel is
    # a dense lane-major slab and all padding sits at the tail (flat >= n).
    # TODO(synk): fuse this gather/transpose into the kernel via
    # PrefetchScalarGridSpec(num_scalar_prefetch=1) + memory_space=pl.ANY DMA
    # if the XLA-side glue ever dominates.
    inp_g = jnp.take(inputs, prim_pad, axis=1).astype(jnp.float32)   # [T, b_pad, 5]
    tgt_g = jnp.take(targets, prim_pad, axis=1).astype(jnp.float32)  # [T, b_pad, 2]
    rows = n_pad // 128                                              # multiple of 8
    inp_t = jnp.transpose(inp_g, (2, 1, 0)).reshape(5, rows, 128)
    tgt_t = jnp.transpose(tgt_g, (2, 1, 0)).reshape(2, rows, 128)

    tile_r = max(8, (min(int(max_tile_rows), rows) // 8) * 8)        # multiple of 8
    num_tiles = -(-rows // tile_r)

    kernel = functools.partial(
        _prediction_loss_kernel,
        background_rate=float(background_rate), n_valid=n, tile_r=tile_r)

    out = pl.pallas_call(
        kernel,
        out_shape=jax.ShapeDtypeStruct((1, 128), jnp.float32),
        grid=(num_tiles,),
        in_specs=[
            pl.BlockSpec((5, tile_r, 128), lambda i: (0, i, 0)),
            pl.BlockSpec((2, tile_r, 128), lambda i: (0, i, 0)),
        ],
        out_specs=pl.BlockSpec((1, 128), lambda i: (0, 0)),
        compiler_params=pltpu.CompilerParams(
            dimension_semantics=("arbitrary",),
            vmem_limit_bytes=_VMEM_LIMIT_BYTES),
    )(inp_t, tgt_t)

    # Mean over all pred_length * batch_size samples, then loss multiplier.
    return (jnp.sum(out) / jnp.float32(n)) * jnp.float32(loss_multiplier)


def _reference_loss(inputs, targets, batch_split, background_rate=0.2):
    """Pure-JAX reference mirroring the PyTorch forward (keep_batch_dim=False)."""
    primaries = batch_split[:-1]
    inp = jnp.take(inputs, primaries, axis=1).reshape(-1, 5)
    tgt = jnp.take(targets, primaries, axis=1).reshape(-1, 2)

    def gaussian_2d(params, x):
        x1, x2 = x[:, 0], x[:, 1]
        mu1, mu2, s1, s2, rho = (params[:, 0], params[:, 1], params[:, 2],
                                 params[:, 3], params[:, 4])
        n1, n2 = x1 - mu1, x2 - mu2
        ss = s1 * s2
        z = (n1 / s1) ** 2 + (n2 / s2) ** 2 - 2.0 * rho * n1 * n2 / ss
        num = jnp.exp(-z / (2.0 * (1.0 - rho ** 2)))
        den = 2.0 * math.pi * ss * jnp.sqrt(1.0 - rho ** 2)
        return num / den

    inp_bg = inp.at[:, 2].set(3.0).at[:, 3].set(3.0).at[:, 4].set(0.0)
    vals = -jnp.log(0.01
                    + background_rate * gaussian_2d(inp_bg, tgt)
                    + (0.99 - background_rate) * gaussian_2d(inp, tgt))
    return jnp.mean(vals)


if __name__ == "__main__":
    key = jax.random.PRNGKey(0)

    def make_case(k, pred_length, num_tracks):
        k_mu, k_s, k_rho, k_tgt = jax.random.split(k, 4)
        mu = jax.random.normal(k_mu, (pred_length, num_tracks, 2), jnp.float32)
        sig = 0.5 + jnp.exp(0.3 * jax.random.normal(
            k_s, (pred_length, num_tracks, 2), jnp.float32))
        rho = 0.9 * jnp.tanh(jax.random.normal(
            k_rho, (pred_length, num_tracks, 1), jnp.float32))
        inputs = jnp.concatenate([mu, sig, rho], axis=-1)            # [T, K, 5]
        targets = jax.random.normal(k_tgt, (pred_length, num_tracks, 2),
                                    jnp.float32)
        return inputs, targets

    k1, k2, k3 = jax.random.split(key, 3)

    # Case 1: tiny (single tile, heavy gather-padding / mask path).
    inputs, targets = make_case(k1, 8, 5)
    batch_split = jnp.array([0, 2, 5], dtype=jnp.int32)   # primaries {0, 2}
    loss = jax.block_until_ready(prediction_loss(inputs, targets, batch_split))
    ref = jax.block_until_ready(_reference_loss(inputs, targets, batch_split))
    assert jnp.allclose(loss, ref, rtol=1e-5, atol=1e-5), (loss, ref)

    # Case 2: larger batch, still a single tile with a masked tail.
    inputs2, targets2 = make_case(k2, 16, 90)
    batch_split2 = jnp.concatenate(
        [jnp.arange(80, dtype=jnp.int32), jnp.array([90], jnp.int32)])
    loss2 = jax.block_until_ready(prediction_loss(inputs2, targets2, batch_split2))
    ref2 = jax.block_until_ready(_reference_loss(inputs2, targets2, batch_split2))
    assert jnp.allclose(loss2, ref2, rtol=1e-5, atol=1e-5), (loss2, ref2)

    # Case 3: force multiple grid steps (small max_tile_rows) so both the
    # unmasked interior-tile path and the masked tail-tile path execute, plus
    # the cross-step accumulator init/accumulate logic.
    inputs3, targets3 = make_case(k3, 8, 200)
    batch_split3 = jnp.concatenate(
        [jnp.arange(200, dtype=jnp.int32), jnp.array([200], jnp.int32)])
    loss3 = jax.block_until_ready(
        prediction_loss(inputs3, targets3, batch_split3, max_tile_rows=8))
    ref3 = jax.block_until_ready(_reference_loss(inputs3, targets3, batch_split3))
    assert jnp.allclose(loss3, ref3, rtol=1e-5, atol=1e-5), (loss3, ref3)

    # TODO(synk): col_loss (collision penalty) is not used in forward() and the
    # keep_batch_dim=True branch is not implemented.
    print("KERNEL_OK")
</pallas_src>

<mosaic_0001>
module attributes {stable_mosaic.version = 11 : i64} {
  func.func @_prediction_loss_kernel(%arg0: i32, %arg1: memref<5x8x128xf32, #tpu.memory_space<vmem>>, %arg2: memref<2x8x128xf32, #tpu.memory_space<vmem>>, %arg3: memref<1x128xf32, #tpu.memory_space<vmem>>) attributes {dimension_semantics = [#tpu.dimension_semantics<arbitrary>], iteration_bounds = array<i64: 1>, scalar_prefetch = 0 : i64, scratch_operands = 0 : i64, tpu.core_type = #tpu.core_type<tc>, window_params = [{transform_indices = @transform_0, window_bounds = array<i64: 5, 8, 128>}, {transform_indices = @transform_1, window_bounds = array<i64: 2, 8, 128>}, {pipeline_mode = #tpu.pipeline_mode<synchronous>, transform_indices = @transform_2, window_bounds = array<i64: 1, 128>}]} {
    %c0_i32 = arith.constant 0 : i32
    %0 = arith.cmpi eq, %arg0, %c0_i32 : i32
    %1 = arith.extui %0 : i1 to i32
    %c0_i32_0 = arith.constant 0 : i32
    %2 = arith.cmpi ne, %1, %c0_i32_0 : i32
    scf.if %2 {
      %cst_30 = arith.constant 0.000000e+00 : f32
      %74 = vector.broadcast %cst_30 : f32 to vector<1x128xf32>
      %c0_31 = arith.constant 0 : index
      %c0_32 = arith.constant 0 : index
      %75 = vector.load %arg3[%c0_31, %c0_32] : memref<1x128xf32, #tpu.memory_space<vmem>>, vector<1x128xf32>
      tpu.vector_store %arg3[%c0_31, %c0_32], %74 {strides = array<i32>} : memref<1x128xf32, #tpu.memory_space<vmem>>, vector<1x128xf32>,
    } else {
    }
    %c0 = arith.constant 0 : index
    %c0_1 = arith.constant 0 : index
    %c0_2 = arith.constant 0 : index
    %3 = vector.load %arg1[%c0, %c0_1, %c0_2] : memref<5x8x128xf32, #tpu.memory_space<vmem>>, vector<1x8x128xf32>
    %4 = vector.shape_cast %3 : vector<1x8x128xf32> to vector<8x128xf32>
    %c1 = arith.constant 1 : index
    %c0_3 = arith.constant 0 : index
    %c0_4 = arith.constant 0 : index
    %5 = vector.load %arg1[%c1, %c0_3, %c0_4] : memref<5x8x128xf32, #tpu.memory_space<vmem>>, vector<1x8x128xf32>
    %6 = vector.shape_cast %5 : vector<1x8x128xf32> to vector<8x128xf32>
    %c2 = arith.constant 2 : index
    %c0_5 = arith.constant 0 : index
    %c0_6 = arith.constant 0 : index
    %7 = vector.load %arg1[%c2, %c0_5, %c0_6] : memref<5x8x128xf32, #tpu.memory_space<vmem>>, vector<1x8x128xf32>
    %8 = vector.shape_cast %7 : vector<1x8x128xf32> to vector<8x128xf32>
    %c3 = arith.constant 3 : index
    %c0_7 = arith.constant 0 : index
    %c0_8 = arith.constant 0 : index
    %9 = vector.load %arg1[%c3, %c0_7, %c0_8] : memref<5x8x128xf32, #tpu.memory_space<vmem>>, vector<1x8x128xf32>
    %10 = vector.shape_cast %9 : vector<1x8x128xf32> to vector<8x128xf32>
    %c4 = arith.constant 4 : index
    %c0_9 = arith.constant 0 : index
    %c0_10 = arith.constant 0 : index
    %11 = vector.load %arg1[%c4, %c0_9, %c0_10] : memref<5x8x128xf32, #tpu.memory_space<vmem>>, vector<1x8x128xf32>
    %12 = vector.shape_cast %11 : vector<1x8x128xf32> to vector<8x128xf32>
    %c0_11 = arith.constant 0 : index
    %c0_12 = arith.constant 0 : index
    %c0_13 = arith.constant 0 : index
    %13 = vector.load %arg2[%c0_11, %c0_12, %c0_13] : memref<2x8x128xf32, #tpu.memory_space<vmem>>, vector<1x8x128xf32>
    %14 = vector.shape_cast %13 : vector<1x8x128xf32> to vector<8x128xf32>
    %c1_14 = arith.constant 1 : index
    %c0_15 = arith.constant 0 : index
    %c0_16 = arith.constant 0 : index
    %15 = vector.load %arg2[%c1_14, %c0_15, %c0_16] : memref<2x8x128xf32, #tpu.memory_space<vmem>>, vector<1x8x128xf32>
    %16 = vector.shape_cast %15 : vector<1x8x128xf32> to vector<8x128xf32>
    %17 = arith.subf %14, %4 : vector<8x128xf32>
    %18 = arith.subf %16, %6 : vector<8x128xf32>
    %19 = arith.mulf %8, %10 : vector<8x128xf32>
    %cst = arith.constant 1.000000e+00 : f32
    %20 = vector.broadcast %cst : f32 to vector<8x128xf32>
    %21 = arith.divf %20, %19 : vector<8x128xf32>
    %22 = arith.mulf %12, %12 : vector<8x128xf32>
    %cst_17 = arith.constant 1.000000e+00 : f32
    %23 = vector.broadcast %cst_17 : f32 to vector<8x128xf32>
    %24 = arith.subf %23, %22 : vector<8x128xf32>
    %25 = math.rsqrt %24 : vector<8x128xf32>
    %26 = arith.mulf %25, %25 : vector<8x128xf32>
    %27 = arith.mulf %17, %10 : vector<8x128xf32>
    %28 = arith.mulf %18, %8 : vector<8x128xf32>
    %29 = arith.mulf %27, %27 : vector<8x128xf32>
    %30 = arith.mulf %28, %28 : vector<8x128xf32>
    %31 = arith.addf %29, %30 : vector<8x128xf32>
    %32 = arith.mulf %21, %21 : vector<8x128xf32>
    %33 = arith.mulf %31, %32 : vector<8x128xf32>
    %cst_18 = arith.constant 2.000000e+00 : f32
    %34 = vector.broadcast %cst_18 : f32 to vector<8x128xf32>
    %35 = arith.mulf %34, %12 : vector<8x128xf32>
    %36 = arith.mulf %35, %17 : vector<8x128xf32>
    %37 = arith.mulf %36, %18 : vector<8x128xf32>
    %38 = arith.mulf %37, %21 : vector<8x128xf32>
    %39 = arith.subf %33, %38 : vector<8x128xf32>
    %cst_19 = arith.constant -5.000000e-01 : f32
    %40 = vector.broadcast %cst_19 : f32 to vector<8x128xf32>
    %41 = arith.mulf %40, %39 : vector<8x128xf32>
    %42 = arith.mulf %41, %26 : vector<8x128xf32>
    %43 = math.exp %42 : vector<8x128xf32>
    %44 = arith.mulf %21, %25 : vector<8x128xf32>
    %45 = arith.mulf %43, %44 : vector<8x128xf32>
    %cst_20 = arith.constant 0.159154937 : f32
    %46 = vector.broadcast %cst_20 : f32 to vector<8x128xf32>
    %47 = arith.mulf %45, %46 : vector<8x128xf32>
    %48 = arith.mulf %17, %17 : vector<8x128xf32>
    %49 = arith.mulf %18, %18 : vector<8x128xf32>
    %50 = arith.addf %48, %49 : vector<8x128xf32>
    %cst_21 = arith.constant -0.055555556 : f32
    %51 = vector.broadcast %cst_21 : f32 to vector<8x128xf32>
    %52 = arith.mulf %50, %51 : vector<8x128xf32>
    %53 = math.exp %52 : vector<8x128xf32>
    %cst_22 = arith.constant 0.0176838823 : f32
    %54 = vector.broadcast %cst_22 : f32 to vector<8x128xf32>
    %55 = arith.mulf %53, %54 : vector<8x128xf32>
    %cst_23 = arith.constant 2.000000e-01 : f32
    %56 = vector.broadcast %cst_23 : f32 to vector<8x128xf32>
    %57 = arith.mulf %56, %55 : vector<8x128xf32>
    %cst_24 = arith.constant 0.00999999977 : f32
    %58 = vector.broadcast %cst_24 : f32 to vector<8x128xf32>
    %59 = arith.addf %58, %57 : vector<8x128xf32>
    %cst_25 = arith.constant 7.900000e-01 : f32
    %60 = vector.broadcast %cst_25 : f32 to vector<8x128xf32>
    %61 = arith.mulf %60, %47 : vector<8x128xf32>
    %62 = arith.addf %59, %61 : vector<8x128xf32>
    %63 = math.log %62 : vector<8x128xf32>
    %cst_26 = arith.constant 0.000000e+00 : f32
    %64 = vector.broadcast %cst_26 : f32 to vector<8x128xf32>
    %65 = arith.subf %64, %63 : vector<8x128xf32>
    %c1024_i32 = arith.constant 1024 : i32
    %66 = arith.muli %arg0, %c1024_i32 : i32
    %c1024_i32_27 = arith.constant 1024 : i32
    %67 = arith.addi %66, %c1024_i32_27 : i32
    %c16_i32 = arith.constant 16 : i32
    %68 = arith.cmpi sle, %67, %c16_i32 : i32
    %69 = arith.extui %68 : i1 to i32
    %c0_i32_28 = arith.constant 0 : i32
    %70 = arith.cmpi ne, %69, %c0_i32_28 : i32
    scf.if %70 {
      %c0_30 = arith.constant 0 : index
      %c0_31 = arith.constant 0 : index
      %74 = vector.load %arg3[%c0_30, %c0_31] : memref<1x128xf32, #tpu.memory_space<vmem>>, vector<1x128xf32>
      %cst_32 = arith.constant dense<0.000000e+00> : vector<128xf32>
      %75 = vector.multi_reduction <add>, %65, %cst_32 [0] : vector<8x128xf32> to vector<128xf32>
      %76 = vector.shape_cast %75 : vector<128xf32> to vector<1x128xf32>
      %77 = arith.addf %74, %76 : vector<1x128xf32>
      %c0_33 = arith.constant 0 : index
      %c0_34 = arith.constant 0 : index
      %78 = vector.load %arg3[%c0_33, %c0_34] : memref<1x128xf32, #tpu.memory_space<vmem>>, vector<1x128xf32>
      tpu.vector_store %arg3[%c0_33, %c0_34], %77 {strides = array<i32>} : memref<1x128xf32, #tpu.memory_space<vmem>>, vector<1x128xf32>,
    } else {
    }
    %true = arith.constant true
    %71 = arith.xori %68, %true : i1
    %72 = arith.extui %71 : i1 to i32
    %c0_i32_29 = arith.constant 0 : i32
    %73 = arith.cmpi ne, %72, %c0_i32_29 : i32
    scf.if %73 {
      %74 = tpu.iota {dimensions = array<i32: 0>} : vector<8x128xi32>
      %75 = tpu.iota {dimensions = array<i32: 1>} : vector<8x128xi32>
      %c128_i32 = arith.constant 128 : i32
      %76 = vector.broadcast %c128_i32 : i32 to vector<8x128xi32>
      %77 = arith.muli %74, %76 : vector<8x128xi32>
      %78 = vector.broadcast %66 : i32 to vector<8x128xi32>
      %79 = arith.addi %78, %77 : vector<8x128xi32>
      %80 = arith.addi %79, %75 : vector<8x128xi32>
      %c16_i32_30 = arith.constant 16 : i32
      %81 = vector.broadcast %c16_i32_30 : i32 to vector<8x128xi32>
      %82 = arith.cmpi slt, %80, %81 : vector<8x128xi32>
      %c0_31 = arith.constant 0 : index
      %c0_32 = arith.constant 0 : index
      %83 = vector.load %arg3[%c0_31, %c0_32] : memref<1x128xf32, #tpu.memory_space<vmem>>, vector<1x128xf32>
      %cst_33 = arith.constant 0.000000e+00 : f32
      %84 = vector.broadcast %cst_33 : f32 to vector<8x128xf32>
      %85 = arith.select %82, %65, %84 : vector<8x128xi1>, vector<8x128xf32>
      %cst_34 = arith.constant dense<0.000000e+00> : vector<128xf32>
      %86 = vector.multi_reduction <add>, %85, %cst_34 [0] : vector<8x128xf32> to vector<128xf32>
      %87 = vector.shape_cast %86 : vector<128xf32> to vector<1x128xf32>
      %88 = arith.addf %83, %87 : vector<1x128xf32>
      %c0_35 = arith.constant 0 : index
      %c0_36 = arith.constant 0 : index
      %89 = vector.load %arg3[%c0_35, %c0_36] : memref<1x128xf32, #tpu.memory_space<vmem>>, vector<1x128xf32>
      tpu.vector_store %arg3[%c0_35, %c0_36], %88 {strides = array<i32>} : memref<1x128xf32, #tpu.memory_space<vmem>>, vector<1x128xf32>,
    } else {
    }
    return
  }
  func.func @transform_0(%arg0: i32) -> (i32, i32, i32) {
    %c0_i32 = arith.constant 0 : i32
    %c0_i32_0 = arith.constant 0 : i32
    %c0_i32_1 = arith.constant 0 : i32
    return %c0_i32, %arg0, %c0_i32_0 : i32, i32, i32
  }
  func.func @transform_1(%arg0: i32) -> (i32, i32, i32) {
    %c0_i32 = arith.constant 0 : i32
    %c0_i32_0 = arith.constant 0 : i32
    %c0_i32_1 = arith.constant 0 : i32
    return %c0_i32, %arg0, %c0_i32_0 : i32, i32, i32
  }
  func.func @transform_2(%arg0: i32) -> (i32, i32) {
    %c0_i32 = arith.constant 0 : i32
    %c0_i32_0 = arith.constant 0 : i32
    %c0_i32_1 = arith.constant 0 : i32
    return %c0_i32, %c0_i32_0 : i32, i32
  }
}

</mosaic_0001>

<llo_original>
// kernel: tpu_custom_call.1
$region0: #{tpu_custom_call.1}
  #allocation0 [shape = 'u32[]', space=smem, size = 0x4, offset = 0x4, fixed_abs, tag = 'smem constant byte address 0x4 - core index']
  #allocation1 [shape = 'u32[144,128]{1,0:T(1,128)}', space=vmem, size = 0x12000, scoped, tag = 'internal scratch']
  %s0 = inlined_call_operand.hbm [shape: f32[5,8,128], index: 0, kind: input, shape index: {}]
  %s1 = inlined_call_operand.hbm [shape: f32[2,8,128], index: 1, kind: input, shape index: {}]
  %s2 = inlined_call_operand.hbm [shape: f32[1,128], index: 2, kind: output, shape index: {}]
  %s3 = sld [smem:[#allocation0]]
  $region38: #{tpu_custom_call.1} parent=0
    _
  %s5 = ssub.s32 1, %s3
  %s6 = scalar_select 0, %s5, %s3
  $region1: #{tpu_custom_call.1} parent=0
    #allocation2 [shape = 'u8[20480]{0}', space=vmem, size = 0x5000, scoped, tag = 'input window, operand 0, single buffered']
    #allocation3 [shape = 's32[1]{0}', space=sflag, size = 0x4, scoped, tag = 'scoped memory for tpu_custom_call.1']
    #allocation4 [shape = 's32[1]{0}', space=sflag, size = 0x4, scoped, tag = 'scoped memory for tpu_custom_call.1']
    #allocation5 [shape = 'u8[8192]{0}', space=vmem, size = 0x2000, scoped, tag = 'input window, operand 1, single buffered']
    #allocation6 [shape = 's32[1]{0}', space=sflag, size = 0x4, scoped, tag = 'scoped memory for tpu_custom_call.1']
    #allocation7 [shape = 'u8[512]{0}', space=vmem, size = 0x400, scoped, tag = 'output window, operand 0, single buffered']
    %7 = vsyncpa [#allocation3], 0
    %8 = vsyncpa [#allocation6], 0
    %9 = vsyncpa [#allocation4], 0
    // Predicated region
    $region2: #{tpu_custom_call.1} parent=1 // pred_check
      _
    $region3: #{tpu_custom_call.1} parent=1 // pred_check_branch
      %11 = sbr.rel (0) target = $region5
    $region4: #{tpu_custom_call.1} parent=1 // pred_region
      %s13 = ssub.s32 640, 640
      %14 = vsyncadd [#allocation3], %s13
      %s15 = sshll.u32 [#allocation2], 4
      %s16 = int_to_ptr.vmem [resolvable:$true] %s15
      %21 = dma.hbm_to_vmem [thread:$0]  %s0, 640, %s16, [#allocation3], 128, 128, 8
    $region5: #{tpu_custom_call.1} parent=1 // pred_fallthru
      _
    // Predicated region
    $region6: #{tpu_custom_call.1} parent=1 // pred_check
      _
    $region7: #{tpu_custom_call.1} parent=1 // pred_check_branch
      %23 = sbr.rel (0) target = $region9
    $region8: #{tpu_custom_call.1} parent=1 // pred_region
      %s25 = ssub.s32 256, 256
      %26 = vsyncadd [#allocation6], %s25
      %s27 = sshll.u32 [#allocation5], 4
      %s28 = int_to_ptr.vmem [resolvable:$true] %s27
      %33 = dma.hbm_to_vmem [thread:$0]  %s1, 256, %s28, [#allocation6], 128, 128, 8
    $region9: #{tpu_custom_call.1} parent=1 // pred_fallthru
      _
    // Predicated region
    $region10: #{tpu_custom_call.1} parent=1 // pred_check
      _
    $region11: #{tpu_custom_call.1} parent=1 // pred_check_branch
      %35 = sbr.rel (0) target = $region13
    $region12: #{tpu_custom_call.1} parent=1 // pred_region
      %36 = dma.done [#allocation3], 640
    $region13: #{tpu_custom_call.1} parent=1 // pred_fallthru
      _
    // Predicated region
    $region14: #{tpu_custom_call.1} parent=1 // pred_check
      _
    $region15: #{tpu_custom_call.1} parent=1 // pred_check_branch
      %38 = sbr.rel (0) target = $region17
    $region16: #{tpu_custom_call.1} parent=1 // pred_region
      %39 = dma.done [#allocation6], 256
    $region17: #{tpu_custom_call.1} parent=1 // pred_fallthru
      _
    %p40 = scmp.eq.s32.totalorder 0, 0
    // Predicated region
    $region18: #{tpu_custom_call.1} parent=1 // pred_check
      %p41 = pneg %p40
    $region19: #{tpu_custom_call.1} parent=1 // pred_check_branch
      %43 = sbr.rel (%p41) target = $region21
    $region20: #{tpu_custom_call.1} parent=1 // pred_region
      %44 = vst [vmem:[#allocation7] sm:$0x1] 0.0
    $region21: #{tpu_custom_call.1} parent=1 // pred_fallthru
      _
    %v45 = vld [vmem:[#allocation2] sm:$0xff]
    %s46 = scalar_lea.vmem [#allocation2], 8
    %v47 = vld [vmem:[%s46] sm:$0xff]
    %s48 = scalar_lea.vmem [#allocation2], 16
    %v49 = vld [vmem:[%s48] sm:$0xff]
    %s50 = scalar_lea.vmem [#allocation2], 24
    %v51 = vld [vmem:[%s50] sm:$0xff]
    %s52 = scalar_lea.vmem [#allocation2], 32
    %v53 = vld [vmem:[%s52] sm:$0xff]
    %v54 = vld [vmem:[#allocation5] sm:$0xff]
    %s55 = scalar_lea.vmem [#allocation5], 8
    %v56 = vld [vmem:[%s55] sm:$0xff]
    %v57 = vsub.f32 %v54, %v45
    %v58 = vsub.f32 %v56, %v47
    %v59 = vmul.f32 %v49, %v51
    %v60 = vrcp.pop %v59
    %v61 = vmul.f32 1.0, %v60
    %v62 = vmul.f32 %v53, %v53
    %v63 = vsub.f32 1.0, %v62
    %v64 = vrsqrt.pop %v63
    %v65 = vmul.f32 %v64, %v64
    %v66 = vmul.f32 %v57, %v51
    %v67 = vmul.f32 %v58, %v49
    %v68 = vmul.f32 %v66, %v66
    %v69 = vmul.f32 %v67, %v67
    %v70 = vadd.f32 %v68, %v69
    %v71 = vmul.f32 %v61, %v61
    %v72 = vmul.f32 %v70, %v71
    %v73 = vmul.f32 %v53, 2.0
    %v74 = vmul.f32 %v73, %v57
    %v75 = vmul.f32 %v74, %v58
    %v76 = vmul.f32 %v75, %v61
    %v77 = vsub.f32 %v72, %v76
    %v78 = vmul.f32 %v77, -0.5
    %v79 = vmul.f32 %v78, %v65
    %v80 = vmul.f32 %v79, 1.442695
    %v81 = vpow.pop %v80
    %v82 = vmul.f32 %v61, %v64
    %v83 = vmul.f32 %v81, %v82
    %v84 = vmul.f32 %v83, 0.15915494
    %v85 = vmul.f32 %v57, %v57
    %v86 = vmul.f32 %v58, %v58
    %v87 = vadd.f32 %v85, %v86
    %v88 = vmul.f32 %v87, -0.055555556
    %v89 = vmul.f32 %v88, 1.442695
    %v90 = vpow.pop %v89
    %v91 = vmul.f32 %v90, 0.017683882
    %v92 = vmul.f32 %v91, 0.2
    %v93 = vadd.f32 %v92, 0.01
    %v94 = vmul.f32 %v84, 0.79
    %v95 = vadd.f32 %v93, %v94
    %v96 = vlog2.pop %v95
    %v97 = vmul.f32 %v96, 0.6931472
    %v98 = vsub.f32 0.0, %v97
    %s99 = smul.u32 0, 1024
    %s100 = sadd.s32 %s99, 1024
    %p101 = scmp.le.s32.totalorder %s100, 16
    // Predicated region
    $region22: #{tpu_custom_call.1} parent=1 // pred_check
      %p102 = pneg %p101
    $region23: #{tpu_custom_call.1} parent=1 // pred_check_branch
      %104 = sbr.rel (%p102) target = $region25
    $region24: #{tpu_custom_call.1} parent=1 // pred_region
      %v105 = vld [vmem:[#allocation7] sm:$0x1]
      %v106 = vrot.slane %v98, 4
      %v107 = vadd.f32 %v98, %v106
      %v108 = vrot.slane %v107, 2
      %v109 = vadd.f32 %v107, %v108
      %v110 = vrot.slane %v109, 1
      %v111 = vadd.f32 %v109, %v110
      %v112 = vadd.f32 %v105, %v111
      %113 = vst [vmem:[#allocation7] sm:$0x1] %v112
    $region25: #{tpu_custom_call.1} parent=1 // pred_fallthru
      _
    %p114 = scmp.gt.s32.totalorder %s100, 16
    // Predicated region
    $region26: #{tpu_custom_call.1} parent=1 // pred_check
      %p115 = pneg %p114
    $region27: #{tpu_custom_call.1} parent=1 // pred_check_branch
      %117 = sbr.rel (%p115) target = $region29
    $region28: #{tpu_custom_call.1} parent=1 // pred_region
      %v118 = vlaneseq
      %v119 = vshrl.u32 %v118, 7
      %v120 = vlaneseq
      %v121 = vand.u32 %v120, 127
      %v122 = vmul.u32 %v119, 128
      %v123 = vstv %s99
      %v124 = vadd.s32 %v123, %v122
      %v125 = vadd.s32 %v124, %v121
      %vm126 = vcmp.lt.s32.totalorder %v125, 16
      %v127 = vld [vmem:[#allocation7] sm:$0x1]
      %v128 = vsel %vm126, %v98, 0.0
      %v129 = vrot.slane %v128, 4
      %v130 = vadd.f32 %v128, %v129
      %v131 = vrot.slane %v130, 2
      %v132 = vadd.f32 %v130, %v131
      %v133 = vrot.slane %v132, 1
      %v134 = vadd.f32 %v132, %v133
      %v135 = vadd.f32 %v127, %v134
      %136 = vst [vmem:[#allocation7] sm:$0x1] %v135
    $region29: #{tpu_custom_call.1} parent=1 // pred_fallthru
      _
    // Predicated region
    $region30: #{tpu_custom_call.1} parent=1 // pred_check
      _
    $region31: #{tpu_custom_call.1} parent=1 // pred_check_branch
      %138 = sbr.rel (0) target = $region33
    $region32: #{tpu_custom_call.1} parent=1 // pred_region
      %s140 = ssub.s32 16, 16
      %141 = vsyncadd [#allocation4], %s140
      %s143 = sshll.u32 [#allocation7], 4
      %s144 = int_to_ptr.vmem [resolvable:$true] %s143
      %146 = dma.vmem_to_hbm [thread:$0]  %s144, 16, %s2, [#allocation4]
    $region33: #{tpu_custom_call.1} parent=1 // pred_fallthru
      _
    // Predicated region
    $region34: #{tpu_custom_call.1} parent=1 // pred_check
      _
    $region35: #{tpu_custom_call.1} parent=1 // pred_check_branch
      %148 = sbr.rel (0) target = $region37
    $region36: #{tpu_custom_call.1} parent=1 // pred_region
      %149 = dma.done [#allocation4], 16
    $region37: #{tpu_custom_call.1} parent=1 // pred_fallthru
      _
    %150 = vsyncpa [#allocation3], 1
    %151 = vsyncpa [#allocation6], 1
    %152 = vsyncpa [#allocation4], 1

</llo_original>
